<compile_context>
chip_gen: v6e
topology: v6e:2x2x1
jax: 0.10.0
libtpu: 0.0.40
codegen_flags: <defaults>
</compile_context>

<pallas_src>
import jax
import jax.numpy as jnp
from jax.experimental import pallas as pl
from jax.experimental.pallas import tpu as pltpu

RATIO_OF_GRADIENT = 0.5  # > 0 so the Sobel / gradient-consistency branch runs


def _vmem_limit_bytes():
    """Per-generation VMEM cap: ~48 MiB on 64-MiB v7x, ~100 MiB on 128-MiB v5e/v6e."""
    cap = 64 * 1024 * 1024
    try:
        cap = int(pltpu.get_tpu_info().vmem_capacity_bytes)
    except Exception:
        pass
    return max(32 * 1024 * 1024, min(cap - 16 * 1024 * 1024, 100 * 1024 * 1024))


def _pick_tile_rows(H, W, target_bytes=1 << 20):
    """Row-strip height: divides H, multiple of 8, keeps a (TR, W) f32 strip ~1 MiB."""
    target = (target_bytes // 4) // max(W, 1)
    target = max(8, min(256, (target // 8) * 8))
    if H <= target:
        return H
    for tr in range(target, 7, -8):
        if H % tr == 0:
            return tr
    return H  # fall back to a single full-frame strip


def hair_matting_loss(pred, mask, img, ratio_of_gradient=RATIO_OF_GRADIENT,
                      tile_rows=None):
    """pred, mask: (B, 1, H, W); img: (B, 3, H, W). Returns the scalar loss.

    mask may be bool/uint8 and img bf16/f16 — the kernel casts per strip, so
    narrower HBM streams directly reduce the memory-bound runtime.
    """
    B, C, H, W = pred.shape
    TR = _pick_tile_rows(H, W) if tile_rows is None else int(tile_rows)
    assert H % TR == 0, "tile_rows must divide H"
    assert TR % 8 == 0 or TR == H, "tile_rows must be a multiple of 8 (or == H)"
    n_strips = H // TR

    pred3 = pred.reshape(B, H, W)
    mask3 = mask.reshape(B, H, W)

    def kernel(pred_ref, mask_ref, img_ref, out_ref,
               c_sh_g, c_dh_g, c_sh_p, c_dh_p):
        si = pl.program_id(1)

        @pl.when(si == 0)
        def _():
            out_ref[...] = jnp.zeros_like(out_ref)
            c_sh_g[...] = jnp.zeros_like(c_sh_g)
            c_dh_g[...] = jnp.zeros_like(c_dh_g)
            c_sh_p[...] = jnp.zeros_like(c_sh_p)
            c_dh_p[...] = jnp.zeros_like(c_dh_p)

        p = pred_ref[0].astype(jnp.float32)       # (TR, W)
        m = mask_ref[0].astype(jnp.float32)       # (TR, W)

        # ---- BCE partial sum (mean taken in the wrapper) --------------------
        # torch.nn.BCELoss clamps each log term at -100.
        log_p = jnp.maximum(jnp.log(p), -100.0)
        log_1mp = jnp.maximum(jnp.log(1.0 - p), -100.0)
        bce_sum = jnp.sum(-(log_1mp + m * (log_p - log_1mp)))

        # ---- grayscale ------------------------------------------------------
        gray = (0.2989 * img_ref[0, 0].astype(jnp.float32)
                + 0.587 * img_ref[0, 1].astype(jnp.float32)
                + 0.114 * img_ref[0, 2].astype(jnp.float32))   # (TR, W)

        # ---- Sobel: lane-axis (horizontal) combine, roll-based --------------
        # sh[i, j] = x[i, j-2] + 2 x[i, j-1] + x[i, j]   (wraps for j < 2)
        # dh[i, j] = x[i, j-2] - x[i, j]
        def horiz(x):
            xr1 = pltpu.roll(x, 1, axis=1)
            xr2 = pltpu.roll(x, 2, axis=1)
            return xr2 + 2.0 * xr1 + x, xr2 - x

        sh_g, dh_g = horiz(gray)
        sh_p, dh_p = horiz(p)

        rows = jax.lax.broadcasted_iota(jnp.int32, (TR, W), 0)
        lane = jax.lax.broadcasted_iota(jnp.int32, (TR, W), 1)

        # ---- Sobel: sublane-axis (vertical) combine with a 2-row carry ------
        # Strip-local row i produces the "valid" 3x3 Sobel output for global
        # row r = si*TR + i - 2 (and column j-2), needing input rows
        # r, r+1, r+2 -> local rows i-2, i-1, i; for i < 2 those come from the
        # carry (last rows of the previous strip), rows 6/7 of the scratch.
        def vert(sh, dh, c_sh, c_dh):
            c_sh6 = c_sh[pl.ds(6, 1), :]          # sh at input row si*TR - 2
            c_sh7 = c_sh[pl.ds(7, 1), :]          # sh at input row si*TR - 1
            c_dh6 = c_dh[pl.ds(6, 1), :]
            c_dh7 = c_dh[pl.ds(7, 1), :]
            sh_m1 = jnp.where(rows >= 1, pltpu.roll(sh, 1, axis=0), c_sh7)
            dh_m1 = jnp.where(rows >= 1, pltpu.roll(dh, 1, axis=0), c_dh7)
            sh_m2 = jnp.where(rows >= 2, pltpu.roll(sh, 2, axis=0),
                              jnp.where(rows == 0, c_sh6, c_sh7))
            dh_m2 = jnp.where(rows >= 2, pltpu.roll(dh, 2, axis=0),
                              jnp.where(rows == 0, c_dh6, c_dh7))
            gy = (sh_m2 - sh) * 0.25
            gx = (dh_m2 + 2.0 * dh_m1 + dh) * 0.25
            return gx, gy

        i_x, i_y = vert(sh_g, dh_g, c_sh_g, c_dh_g)
        g_x, g_y = vert(sh_p, dh_p, c_sh_p, c_dh_p)

        # carry the last 8 input rows' sh/dh for the next strip (8-aligned copy)
        if n_strips > 1:
            c_sh_g[...] = sh_g[TR - 8:, :]
            c_dh_g[...] = dh_g[TR - 8:, :]
            c_sh_p[...] = sh_p[TR - 8:, :]
            c_dh_p[...] = dh_p[TR - 8:, :]

        # valid Sobel outputs: global output row >= 0 (strip-0 halo) and lane >= 2
        valid = jnp.logical_and(rows + si * TR >= 2, lane >= 2)
        g = jnp.sqrt(g_x * g_x + g_y * g_y + 1e-6)
        rang = 1.0 - (i_x * g_x + i_y * g_y) ** 2
        num = jnp.sum(jnp.where(valid, g * rang, 0.0))
        den = jnp.sum(jnp.where(valid, g, 0.0))

        # accumulate the three per-sample partial sums into the resident
        # lane-dense (1, 8, 128) output block
        lanes_out = jax.lax.broadcasted_iota(jnp.int32, out_ref.shape, 2)
        out_ref[...] += (jnp.where(lanes_out == 0, bce_sum, 0.0)
                         + jnp.where(lanes_out == 1, num, 0.0)
                         + jnp.where(lanes_out == 2, den, 0.0))

    stats = pl.pallas_call(
        kernel,
        out_shape=jax.ShapeDtypeStruct((B, 8, 128), jnp.float32),
        grid_spec=pltpu.PrefetchScalarGridSpec(
            num_scalar_prefetch=0,
            grid=(B, n_strips),
            in_specs=[
                pl.BlockSpec((1, TR, W), lambda b, s: (b, s, 0)),
                pl.BlockSpec((1, TR, W), lambda b, s: (b, s, 0)),
                # largest stream; bump to pipeline_mode=pl.Buffered(3) if xprof
                # shows exposed per-strip DMA
                pl.BlockSpec((1, 3, TR, W), lambda b, s: (b, 0, s, 0)),
            ],
            out_specs=pl.BlockSpec((1, 8, 128), lambda b, s: (b, 0, 0)),
            scratch_shapes=[pltpu.VMEM((8, W), jnp.float32)] * 4,
        ),
        compiler_params=pltpu.CompilerParams(
            dimension_semantics=("parallel", "arbitrary"),
            vmem_limit_bytes=_vmem_limit_bytes(),
        ),
    )(pred3, mask3, img)

    # BCELoss(reduction='mean') over all B*C*H*W elements.
    loss = jnp.sum(stats[:, 0, 0]) / (B * C * H * W)
    if ratio_of_gradient > 0:
        # NOTE: matches the PyTorch module exactly — no eps in the denominator
        # (sum(G) can only be ~0 for a spatially constant pred).
        loss2 = jnp.mean(stats[:, 0, 1] / stats[:, 0, 2])
        loss = loss + loss2 * ratio_of_gradient
    return loss


# ------------------------------ pure-JAX reference ---------------------------

def _sobel_valid_ref(x):
    gx = ((x[..., :-2, :-2] - x[..., :-2, 2:])
          + 2.0 * (x[..., 1:-1, :-2] - x[..., 1:-1, 2:])
          + (x[..., 2:, :-2] - x[..., 2:, 2:])) * 0.25
    gy = ((x[..., :-2, :-2] + 2.0 * x[..., :-2, 1:-1] + x[..., :-2, 2:])
          - (x[..., 2:, :-2] + 2.0 * x[..., 2:, 1:-1] + x[..., 2:, 2:])) * 0.25
    return gx, gy


def _reference_loss(pred, mask, img, ratio_of_gradient=RATIO_OF_GRADIENT):
    p = pred[:, 0].astype(jnp.float32)
    m = mask[:, 0].astype(jnp.float32)
    im = img.astype(jnp.float32)
    bce = -(m * jnp.maximum(jnp.log(p), -100.0)
            + (1.0 - m) * jnp.maximum(jnp.log(1.0 - p), -100.0))
    loss = jnp.mean(bce)
    gray = 0.2989 * im[:, 0] + 0.587 * im[:, 1] + 0.114 * im[:, 2]
    i_x, i_y = _sobel_valid_ref(gray)
    g_x, g_y = _sobel_valid_ref(p)
    g = jnp.sqrt(g_x ** 2 + g_y ** 2 + 1e-6)
    rang = 1.0 - (i_x * g_x + i_y * g_y) ** 2
    loss2 = jnp.mean(jnp.sum(g * rang, axis=(1, 2)) / jnp.sum(g, axis=(1, 2)))
    return loss + loss2 * ratio_of_gradient


if __name__ == "__main__":
    B, H, W = 2, 32, 128
    key = jax.random.PRNGKey(0)
    k1, k2, k3 = jax.random.split(key, 3)

    # pred must lie in (0, 1) for BCELoss
    pred = jax.nn.sigmoid(jax.random.normal(k1, (B, 1, H, W), jnp.float32))
    mask = (jax.random.uniform(k2, (B, 1, H, W)) > 0.5).astype(jnp.float32)
    img = jax.random.uniform(k3, (B, 3, H, W), jnp.float32)

    # tile_rows=8 -> 4 row strips per sample, exercising the halo-carry path.
    loss = hair_matting_loss(pred, mask, img, tile_rows=8)
    jax.block_until_ready(loss)

    ref = _reference_loss(pred, mask, img)
    assert jnp.allclose(loss, ref, rtol=1e-4, atol=1e-5), (loss, ref)

    print("KERNEL_OK")
</pallas_src>

<mosaic_0001>
module attributes {stable_mosaic.version = 11 : i64} {
  func.func @kernel(%arg0: i32, %arg1: i32, %arg2: memref<1x8x128xf32, #tpu.memory_space<vmem>>, %arg3: memref<1x8x128xf32, #tpu.memory_space<vmem>>, %arg4: memref<1x3x8x128xf32, #tpu.memory_space<vmem>>, %arg5: memref<1x8x128xf32, #tpu.memory_space<vmem>>, %arg6: memref<8x128xf32, #tpu.memory_space<vmem>>, %arg7: memref<8x128xf32, #tpu.memory_space<vmem>>, %arg8: memref<8x128xf32, #tpu.memory_space<vmem>>, %arg9: memref<8x128xf32, #tpu.memory_space<vmem>>) attributes {dimension_semantics = [#tpu.dimension_semantics<parallel>, #tpu.dimension_semantics<arbitrary>], iteration_bounds = array<i64: 2, 4>, scalar_prefetch = 0 : i64, scratch_operands = 4 : i64, tpu.core_type = #tpu.core_type<tc>, window_params = [{transform_indices = @transform_0, window_bounds = array<i64: 1, 8, 128>}, {transform_indices = @transform_1, window_bounds = array<i64: 1, 8, 128>}, {transform_indices = @transform_2, window_bounds = array<i64: 1, 3, 8, 128>}, {transform_indices = @transform_3, window_bounds = array<i64: 1, 8, 128>}]} {
    %c0_i32 = arith.constant 0 : i32
    %0 = arith.cmpi eq, %arg1, %c0_i32 : i32
    %1 = arith.extui %0 : i1 to i32
    %c0_i32_0 = arith.constant 0 : i32
    %2 = arith.cmpi ne, %1, %c0_i32_0 : i32
    scf.if %2 {
      %cst_91 = arith.constant 0.000000e+00 : f32
      %194 = vector.broadcast %cst_91 : f32 to vector<1x8x128xf32>
      %c0_92 = arith.constant 0 : index
      %c0_93 = arith.constant 0 : index
      %c0_94 = arith.constant 0 : index
      %195 = vector.load %arg5[%c0_92, %c0_93, %c0_94] : memref<1x8x128xf32, #tpu.memory_space<vmem>>, vector<1x8x128xf32>
      tpu.vector_store %arg5[%c0_92, %c0_93, %c0_94], %194 {strides = array<i32>} : memref<1x8x128xf32, #tpu.memory_space<vmem>>, vector<1x8x128xf32>,
      %cst_95 = arith.constant 0.000000e+00 : f32
      %196 = vector.broadcast %cst_95 : f32 to vector<8x128xf32>
      %c0_96 = arith.constant 0 : index
      %c0_97 = arith.constant 0 : index
      %197 = vector.load %arg6[%c0_96, %c0_97] : memref<8x128xf32, #tpu.memory_space<vmem>>, vector<8x128xf32>
      tpu.vector_store %arg6[%c0_96, %c0_97], %196 {strides = array<i32>} : memref<8x128xf32, #tpu.memory_space<vmem>>, vector<8x128xf32>,
      %cst_98 = arith.constant 0.000000e+00 : f32
      %198 = vector.broadcast %cst_98 : f32 to vector<8x128xf32>
      %c0_99 = arith.constant 0 : index
      %c0_100 = arith.constant 0 : index
      %199 = vector.load %arg7[%c0_99, %c0_100] : memref<8x128xf32, #tpu.memory_space<vmem>>, vector<8x128xf32>
      tpu.vector_store %arg7[%c0_99, %c0_100], %198 {strides = array<i32>} : memref<8x128xf32, #tpu.memory_space<vmem>>, vector<8x128xf32>,
      %cst_101 = arith.constant 0.000000e+00 : f32
      %200 = vector.broadcast %cst_101 : f32 to vector<8x128xf32>
      %c0_102 = arith.constant 0 : index
      %c0_103 = arith.constant 0 : index
      %201 = vector.load %arg8[%c0_102, %c0_103] : memref<8x128xf32, #tpu.memory_space<vmem>>, vector<8x128xf32>
      tpu.vector_store %arg8[%c0_102, %c0_103], %200 {strides = array<i32>} : memref<8x128xf32, #tpu.memory_space<vmem>>, vector<8x128xf32>,
      %cst_104 = arith.constant 0.000000e+00 : f32
      %202 = vector.broadcast %cst_104 : f32 to vector<8x128xf32>
      %c0_105 = arith.constant 0 : index
      %c0_106 = arith.constant 0 : index
      %203 = vector.load %arg9[%c0_105, %c0_106] : memref<8x128xf32, #tpu.memory_space<vmem>>, vector<8x128xf32>
      tpu.vector_store %arg9[%c0_105, %c0_106], %202 {strides = array<i32>} : memref<8x128xf32, #tpu.memory_space<vmem>>, vector<8x128xf32>,
    } else {
    }
    %c0 = arith.constant 0 : index
    %c0_1 = arith.constant 0 : index
    %c0_2 = arith.constant 0 : index
    %3 = vector.load %arg2[%c0, %c0_1, %c0_2] : memref<1x8x128xf32, #tpu.memory_space<vmem>>, vector<1x8x128xf32>
    %4 = vector.shape_cast %3 : vector<1x8x128xf32> to vector<8x128xf32>
    %c0_3 = arith.constant 0 : index
    %c0_4 = arith.constant 0 : index
    %c0_5 = arith.constant 0 : index
    %5 = vector.load %arg3[%c0_3, %c0_4, %c0_5] : memref<1x8x128xf32, #tpu.memory_space<vmem>>, vector<1x8x128xf32>
    %6 = vector.shape_cast %5 : vector<1x8x128xf32> to vector<8x128xf32>
    %7 = math.log %4 : vector<8x128xf32>
    %cst = arith.constant -1.000000e+02 : f32
    %8 = vector.broadcast %cst : f32 to vector<8x128xf32>
    %9 = arith.maximumf %7, %8 : vector<8x128xf32>
    %cst_6 = arith.constant 1.000000e+00 : f32
    %10 = vector.broadcast %cst_6 : f32 to vector<8x128xf32>
    %11 = arith.subf %10, %4 : vector<8x128xf32>
    %12 = math.log %11 : vector<8x128xf32>
    %cst_7 = arith.constant -1.000000e+02 : f32
    %13 = vector.broadcast %cst_7 : f32 to vector<8x128xf32>
    %14 = arith.maximumf %12, %13 : vector<8x128xf32>
    %15 = arith.subf %9, %14 : vector<8x128xf32>
    %16 = arith.mulf %6, %15 : vector<8x128xf32>
    %17 = arith.addf %14, %16 : vector<8x128xf32>
    %cst_8 = arith.constant 0.000000e+00 : f32
    %18 = vector.broadcast %cst_8 : f32 to vector<8x128xf32>
    %19 = arith.subf %18, %17 : vector<8x128xf32>
    %20 = vector.shape_cast %19 : vector<8x128xf32> to vector<1x8x128xf32>
    %cst_9 = arith.constant dense<0.000000e+00> : vector<1xf32>
    %21 = vector.multi_reduction <add>, %20, %cst_9 [1, 2] : vector<1x8x128xf32> to vector<1xf32>
    %22 = vector.shape_cast %21 : vector<1xf32> to vector<1x1x1xf32>
    %23 = vector.extract %22[0, 0, 0] : f32 from vector<1x1x1xf32>
    %c0_10 = arith.constant 0 : index
    %c0_11 = arith.constant 0 : index
    %c0_12 = arith.constant 0 : index
    %c0_13 = arith.constant 0 : index
    %24 = vector.load %arg4[%c0_10, %c0_11, %c0_12, %c0_13] : memref<1x3x8x128xf32, #tpu.memory_space<vmem>>, vector<1x1x8x128xf32>
    %25 = vector.shape_cast %24 : vector<1x1x8x128xf32> to vector<8x128xf32>
    %cst_14 = arith.constant 2.989000e-01 : f32
    %26 = vector.broadcast %cst_14 : f32 to vector<8x128xf32>
    %27 = arith.mulf %26, %25 : vector<8x128xf32>
    %c0_15 = arith.constant 0 : index
    %c1 = arith.constant 1 : index
    %c0_16 = arith.constant 0 : index
    %c0_17 = arith.constant 0 : index
    %28 = vector.load %arg4[%c0_15, %c1, %c0_16, %c0_17] : memref<1x3x8x128xf32, #tpu.memory_space<vmem>>, vector<1x1x8x128xf32>
    %29 = vector.shape_cast %28 : vector<1x1x8x128xf32> to vector<8x128xf32>
    %cst_18 = arith.constant 5.870000e-01 : f32
    %30 = vector.broadcast %cst_18 : f32 to vector<8x128xf32>
    %31 = arith.mulf %30, %29 : vector<8x128xf32>
    %32 = arith.addf %27, %31 : vector<8x128xf32>
    %c0_19 = arith.constant 0 : index
    %c2 = arith.constant 2 : index
    %c0_20 = arith.constant 0 : index
    %c0_21 = arith.constant 0 : index
    %33 = vector.load %arg4[%c0_19, %c2, %c0_20, %c0_21] : memref<1x3x8x128xf32, #tpu.memory_space<vmem>>, vector<1x1x8x128xf32>
    %34 = vector.shape_cast %33 : vector<1x1x8x128xf32> to vector<8x128xf32>
    %cst_22 = arith.constant 1.140000e-01 : f32
    %35 = vector.broadcast %cst_22 : f32 to vector<8x128xf32>
    %36 = arith.mulf %35, %34 : vector<8x128xf32>
    %37 = arith.addf %32, %36 : vector<8x128xf32>
    %c1_i32 = arith.constant 1 : i32
    %38 = tpu.dynamic_rotate %37 by %c1_i32 dim 1 : vector<8x128xf32>, i32 -> vector<8x128xf32>
    %c2_i32 = arith.constant 2 : i32
    %39 = tpu.dynamic_rotate %37 by %c2_i32 dim 1 : vector<8x128xf32>, i32 -> vector<8x128xf32>
    %cst_23 = arith.constant 2.000000e+00 : f32
    %40 = vector.broadcast %cst_23 : f32 to vector<8x128xf32>
    %41 = arith.mulf %40, %38 : vector<8x128xf32>
    %42 = arith.addf %39, %41 : vector<8x128xf32>
    %43 = arith.addf %42, %37 : vector<8x128xf32>
    %44 = arith.subf %39, %37 : vector<8x128xf32>
    %c1_i32_24 = arith.constant 1 : i32
    %45 = tpu.dynamic_rotate %4 by %c1_i32_24 dim 1 : vector<8x128xf32>, i32 -> vector<8x128xf32>
    %c2_i32_25 = arith.constant 2 : i32
    %46 = tpu.dynamic_rotate %4 by %c2_i32_25 dim 1 : vector<8x128xf32>, i32 -> vector<8x128xf32>
    %cst_26 = arith.constant 2.000000e+00 : f32
    %47 = vector.broadcast %cst_26 : f32 to vector<8x128xf32>
    %48 = arith.mulf %47, %45 : vector<8x128xf32>
    %49 = arith.addf %46, %48 : vector<8x128xf32>
    %50 = arith.addf %49, %4 : vector<8x128xf32>
    %51 = arith.subf %46, %4 : vector<8x128xf32>
    %52 = tpu.iota {dimensions = array<i32: 0>} : vector<8x128xi32>
    %53 = tpu.iota {dimensions = array<i32: 1>} : vector<8x128xi32>
    %c6 = arith.constant 6 : index
    %c0_27 = arith.constant 0 : index
    %54 = vector.load %arg6[%c6, %c0_27] : memref<8x128xf32, #tpu.memory_space<vmem>>, vector<1x128xf32>
    %c7 = arith.constant 7 : index
    %c0_28 = arith.constant 0 : index
    %55 = vector.load %arg6[%c7, %c0_28] : memref<8x128xf32, #tpu.memory_space<vmem>>, vector<1x128xf32>
    %c6_29 = arith.constant 6 : index
    %c0_30 = arith.constant 0 : index
    %56 = vector.load %arg7[%c6_29, %c0_30] : memref<8x128xf32, #tpu.memory_space<vmem>>, vector<1x128xf32>
    %c7_31 = arith.constant 7 : index
    %c0_32 = arith.constant 0 : index
    %57 = vector.load %arg7[%c7_31, %c0_32] : memref<8x128xf32, #tpu.memory_space<vmem>>, vector<1x128xf32>
    %c1_i32_33 = arith.constant 1 : i32
    %58 = vector.broadcast %c1_i32_33 : i32 to vector<8x128xi32>
    %59 = arith.cmpi sge, %52, %58 : vector<8x128xi32>
    %c1_i32_34 = arith.constant 1 : i32
    %60 = tpu.dynamic_rotate %44 by %c1_i32_34 dim 0 : vector<8x128xf32>, i32 -> vector<8x128xf32>
    %61 = vector.shape_cast %57 : vector<1x128xf32> to vector<1x128xf32>
    %62 = vector.broadcast %61 : vector<1x128xf32> to vector<8x128xf32>
    %63 = arith.select %59, %60, %62 : vector<8x128xi1>, vector<8x128xf32>
    %c2_i32_35 = arith.constant 2 : i32
    %64 = vector.broadcast %c2_i32_35 : i32 to vector<8x128xi32>
    %65 = arith.cmpi sge, %52, %64 : vector<8x128xi32>
    %c2_i32_36 = arith.constant 2 : i32
    %66 = tpu.dynamic_rotate %43 by %c2_i32_36 dim 0 : vector<8x128xf32>, i32 -> vector<8x128xf32>
    %c0_i32_37 = arith.constant 0 : i32
    %67 = vector.broadcast %c0_i32_37 : i32 to vector<8x128xi32>
    %68 = arith.cmpi eq, %52, %67 : vector<8x128xi32>
    %69 = vector.shape_cast %54 : vector<1x128xf32> to vector<1x128xf32>
    %70 = vector.broadcast %69 : vector<1x128xf32> to vector<8x128xf32>
    %71 = vector.shape_cast %55 : vector<1x128xf32> to vector<1x128xf32>
    %72 = vector.broadcast %71 : vector<1x128xf32> to vector<8x128xf32>
    %73 = arith.select %68, %70, %72 : vector<8x128xi1>, vector<8x128xf32>
    %74 = arith.select %65, %66, %73 : vector<8x128xi1>, vector<8x128xf32>
    %c2_i32_38 = arith.constant 2 : i32
    %75 = vector.broadcast %c2_i32_38 : i32 to vector<8x128xi32>
    %76 = arith.cmpi sge, %52, %75 : vector<8x128xi32>
    %c2_i32_39 = arith.constant 2 : i32
    %77 = tpu.dynamic_rotate %44 by %c2_i32_39 dim 0 : vector<8x128xf32>, i32 -> vector<8x128xf32>
    %c0_i32_40 = arith.constant 0 : i32
    %78 = vector.broadcast %c0_i32_40 : i32 to vector<8x128xi32>
    %79 = arith.cmpi eq, %52, %78 : vector<8x128xi32>
    %80 = vector.shape_cast %56 : vector<1x128xf32> to vector<1x128xf32>
    %81 = vector.broadcast %80 : vector<1x128xf32> to vector<8x128xf32>
    %82 = vector.shape_cast %57 : vector<1x128xf32> to vector<1x128xf32>
    %83 = vector.broadcast %82 : vector<1x128xf32> to vector<8x128xf32>
    %84 = arith.select %79, %81, %83 : vector<8x128xi1>, vector<8x128xf32>
    %85 = arith.select %76, %77, %84 : vector<8x128xi1>, vector<8x128xf32>
    %86 = arith.subf %74, %43 : vector<8x128xf32>
    %cst_41 = arith.constant 2.500000e-01 : f32
    %87 = vector.broadcast %cst_41 : f32 to vector<8x128xf32>
    %88 = arith.mulf %86, %87 : vector<8x128xf32>
    %cst_42 = arith.constant 2.000000e+00 : f32
    %89 = vector.broadcast %cst_42 : f32 to vector<8x128xf32>
    %90 = arith.mulf %89, %63 : vector<8x128xf32>
    %91 = arith.addf %85, %90 : vector<8x128xf32>
    %92 = arith.addf %91, %44 : vector<8x128xf32>
    %cst_43 = arith.constant 2.500000e-01 : f32
    %93 = vector.broadcast %cst_43 : f32 to vector<8x128xf32>
    %94 = arith.mulf %92, %93 : vector<8x128xf32>
    %c6_44 = arith.constant 6 : index
    %c0_45 = arith.constant 0 : index
    %95 = vector.load %arg8[%c6_44, %c0_45] : memref<8x128xf32, #tpu.memory_space<vmem>>, vector<1x128xf32>
    %c7_46 = arith.constant 7 : index
    %c0_47 = arith.constant 0 : index
    %96 = vector.load %arg8[%c7_46, %c0_47] : memref<8x128xf32, #tpu.memory_space<vmem>>, vector<1x128xf32>
    %c6_48 = arith.constant 6 : index
    %c0_49 = arith.constant 0 : index
    %97 = vector.load %arg9[%c6_48, %c0_49] : memref<8x128xf32, #tpu.memory_space<vmem>>, vector<1x128xf32>
    %c7_50 = arith.constant 7 : index
    %c0_51 = arith.constant 0 : index
    %98 = vector.load %arg9[%c7_50, %c0_51] : memref<8x128xf32, #tpu.memory_space<vmem>>, vector<1x128xf32>
    %c1_i32_52 = arith.constant 1 : i32
    %99 = vector.broadcast %c1_i32_52 : i32 to vector<8x128xi32>
    %100 = arith.cmpi sge, %52, %99 : vector<8x128xi32>
    %c1_i32_53 = arith.constant 1 : i32
    %101 = tpu.dynamic_rotate %51 by %c1_i32_53 dim 0 : vector<8x128xf32>, i32 -> vector<8x128xf32>
    %102 = vector.shape_cast %98 : vector<1x128xf32> to vector<1x128xf32>
    %103 = vector.broadcast %102 : vector<1x128xf32> to vector<8x128xf32>
    %104 = arith.select %100, %101, %103 : vector<8x128xi1>, vector<8x128xf32>
    %c2_i32_54 = arith.constant 2 : i32
    %105 = vector.broadcast %c2_i32_54 : i32 to vector<8x128xi32>
    %106 = arith.cmpi sge, %52, %105 : vector<8x128xi32>
    %c2_i32_55 = arith.constant 2 : i32
    %107 = tpu.dynamic_rotate %50 by %c2_i32_55 dim 0 : vector<8x128xf32>, i32 -> vector<8x128xf32>
    %c0_i32_56 = arith.constant 0 : i32
    %108 = vector.broadcast %c0_i32_56 : i32 to vector<8x128xi32>
    %109 = arith.cmpi eq, %52, %108 : vector<8x128xi32>
    %110 = vector.shape_cast %95 : vector<1x128xf32> to vector<1x128xf32>
    %111 = vector.broadcast %110 : vector<1x128xf32> to vector<8x128xf32>
    %112 = vector.shape_cast %96 : vector<1x128xf32> to vector<1x128xf32>
    %113 = vector.broadcast %112 : vector<1x128xf32> to vector<8x128xf32>
    %114 = arith.select %109, %111, %113 : vector<8x128xi1>, vector<8x128xf32>
    %115 = arith.select %106, %107, %114 : vector<8x128xi1>, vector<8x128xf32>
    %c2_i32_57 = arith.constant 2 : i32
    %116 = vector.broadcast %c2_i32_57 : i32 to vector<8x128xi32>
    %117 = arith.cmpi sge, %52, %116 : vector<8x128xi32>
    %c2_i32_58 = arith.constant 2 : i32
    %118 = tpu.dynamic_rotate %51 by %c2_i32_58 dim 0 : vector<8x128xf32>, i32 -> vector<8x128xf32>
    %c0_i32_59 = arith.constant 0 : i32
    %119 = vector.broadcast %c0_i32_59 : i32 to vector<8x128xi32>
    %120 = arith.cmpi eq, %52, %119 : vector<8x128xi32>
    %121 = vector.shape_cast %97 : vector<1x128xf32> to vector<1x128xf32>
    %122 = vector.broadcast %121 : vector<1x128xf32> to vector<8x128xf32>
    %123 = vector.shape_cast %98 : vector<1x128xf32> to vector<1x128xf32>
    %124 = vector.broadcast %123 : vector<1x128xf32> to vector<8x128xf32>
    %125 = arith.select %120, %122, %124 : vector<8x128xi1>, vector<8x128xf32>
    %126 = arith.select %117, %118, %125 : vector<8x128xi1>, vector<8x128xf32>
    %127 = arith.subf %115, %50 : vector<8x128xf32>
    %cst_60 = arith.constant 2.500000e-01 : f32
    %128 = vector.broadcast %cst_60 : f32 to vector<8x128xf32>
    %129 = arith.mulf %127, %128 : vector<8x128xf32>
    %cst_61 = arith.constant 2.000000e+00 : f32
    %130 = vector.broadcast %cst_61 : f32 to vector<8x128xf32>
    %131 = arith.mulf %130, %104 : vector<8x128xf32>
    %132 = arith.addf %126, %131 : vector<8x128xf32>
    %133 = arith.addf %132, %51 : vector<8x128xf32>
    %cst_62 = arith.constant 2.500000e-01 : f32
    %134 = vector.broadcast %cst_62 : f32 to vector<8x128xf32>
    %135 = arith.mulf %133, %134 : vector<8x128xf32>
    %c0_63 = arith.constant 0 : index
    %c0_64 = arith.constant 0 : index
    %136 = vector.load %arg6[%c0_63, %c0_64] : memref<8x128xf32, #tpu.memory_space<vmem>>, vector<8x128xf32>
    tpu.vector_store %arg6[%c0_63, %c0_64], %43 {strides = array<i32>} : memref<8x128xf32, #tpu.memory_space<vmem>>, vector<8x128xf32>,
    %c0_65 = arith.constant 0 : index
    %c0_66 = arith.constant 0 : index
    %137 = vector.load %arg7[%c0_65, %c0_66] : memref<8x128xf32, #tpu.memory_space<vmem>>, vector<8x128xf32>
    tpu.vector_store %arg7[%c0_65, %c0_66], %44 {strides = array<i32>} : memref<8x128xf32, #tpu.memory_space<vmem>>, vector<8x128xf32>,
    %c0_67 = arith.constant 0 : index
    %c0_68 = arith.constant 0 : index
    %138 = vector.load %arg8[%c0_67, %c0_68] : memref<8x128xf32, #tpu.memory_space<vmem>>, vector<8x128xf32>
    tpu.vector_store %arg8[%c0_67, %c0_68], %50 {strides = array<i32>} : memref<8x128xf32, #tpu.memory_space<vmem>>, vector<8x128xf32>,
    %c0_69 = arith.constant 0 : index
    %c0_70 = arith.constant 0 : index
    %139 = vector.load %arg9[%c0_69, %c0_70] : memref<8x128xf32, #tpu.memory_space<vmem>>, vector<8x128xf32>
    tpu.vector_store %arg9[%c0_69, %c0_70], %51 {strides = array<i32>} : memref<8x128xf32, #tpu.memory_space<vmem>>, vector<8x128xf32>,
    %c8_i32 = arith.constant 8 : i32
    %140 = arith.muli %arg1, %c8_i32 : i32
    %141 = vector.broadcast %140 : i32 to vector<8x128xi32>
    %142 = arith.addi %52, %141 : vector<8x128xi32>
    %c2_i32_71 = arith.constant 2 : i32
    %143 = vector.broadcast %c2_i32_71 : i32 to vector<8x128xi32>
    %144 = arith.cmpi sge, %142, %143 : vector<8x128xi32>
    %c2_i32_72 = arith.constant 2 : i32
    %145 = vector.broadcast %c2_i32_72 : i32 to vector<8x128xi32>
    %146 = arith.cmpi sge, %53, %145 : vector<8x128xi32>
    %147 = arith.andi %144, %146 : vector<8x128xi1>
    %148 = arith.mulf %135, %135 : vector<8x128xf32>
    %149 = arith.mulf %129, %129 : vector<8x128xf32>
    %150 = arith.addf %148, %149 : vector<8x128xf32>
    %cst_73 = arith.constant 9.99999997E-7 : f32
    %151 = vector.broadcast %cst_73 : f32 to vector<8x128xf32>
    %152 = arith.addf %150, %151 : vector<8x128xf32>
    %153 = math.sqrt %152 : vector<8x128xf32>
    %154 = arith.mulf %94, %135 : vector<8x128xf32>
    %155 = arith.mulf %88, %129 : vector<8x128xf32>
    %156 = arith.addf %154, %155 : vector<8x128xf32>
    %157 = arith.mulf %156, %156 : vector<8x128xf32>
    %cst_74 = arith.constant 1.000000e+00 : f32
    %158 = vector.broadcast %cst_74 : f32 to vector<8x128xf32>
    %159 = arith.subf %158, %157 : vector<8x128xf32>
    %160 = arith.mulf %153, %159 : vector<8x128xf32>
    %cst_75 = arith.constant 0.000000e+00 : f32
    %161 = vector.broadcast %cst_75 : f32 to vector<8x128xf32>
    %162 = arith.select %147, %160, %161 : vector<8x128xi1>, vector<8x128xf32>
    %163 = vector.shape_cast %162 : vector<8x128xf32> to vector<1x8x128xf32>
    %cst_76 = arith.constant dense<0.000000e+00> : vector<1xf32>
    %164 = vector.multi_reduction <add>, %163, %cst_76 [1, 2] : vector<1x8x128xf32> to vector<1xf32>
    %165 = vector.shape_cast %164 : vector<1xf32> to vector<1x1x1xf32>
    %166 = vector.extract %165[0, 0, 0] : f32 from vector<1x1x1xf32>
    %cst_77 = arith.constant 0.000000e+00 : f32
    %167 = vector.broadcast %cst_77 : f32 to vector<8x128xf32>
    %168 = arith.select %147, %153, %167 : vector<8x128xi1>, vector<8x128xf32>
    %169 = vector.shape_cast %168 : vector<8x128xf32> to vector<1x8x128xf32>
    %cst_78 = arith.constant dense<0.000000e+00> : vector<1xf32>
    %170 = vector.multi_reduction <add>, %169, %cst_78 [1, 2] : vector<1x8x128xf32> to vector<1xf32>
    %171 = vector.shape_cast %170 : vector<1xf32> to vector<1x1x1xf32>
    %172 = vector.extract %171[0, 0, 0] : f32 from vector<1x1x1xf32>
    %173 = tpu.iota {dimensions = array<i32: 2>} : vector<1x8x128xi32>
    %c0_79 = arith.constant 0 : index
    %c0_80 = arith.constant 0 : index
    %c0_81 = arith.constant 0 : index
    %174 = vector.load %arg5[%c0_79, %c0_80, %c0_81] : memref<1x8x128xf32, #tpu.memory_space<vmem>>, vector<1x8x128xf32>
    %c0_i32_82 = arith.constant 0 : i32
    %175 = vector.broadcast %c0_i32_82 : i32 to vector<1x8x128xi32>
    %176 = arith.cmpi eq, %173, %175 : vector<1x8x128xi32>
    %cst_83 = arith.constant 0.000000e+00 : f32
    %177 = vector.broadcast %23 : f32 to vector<1x8x128xf32>
    %178 = vector.broadcast %cst_83 : f32 to vector<1x8x128xf32>
    %179 = arith.select %176, %177, %178 : vector<1x8x128xi1>, vector<1x8x128xf32>
    %c1_i32_84 = arith.constant 1 : i32
    %180 = vector.broadcast %c1_i32_84 : i32 to vector<1x8x128xi32>
    %181 = arith.cmpi eq, %173, %180 : vector<1x8x128xi32>
    %cst_85 = arith.constant 0.000000e+00 : f32
    %182 = vector.broadcast %166 : f32 to vector<1x8x128xf32>
    %183 = vector.broadcast %cst_85 : f32 to vector<1x8x128xf32>
    %184 = arith.select %181, %182, %183 : vector<1x8x128xi1>, vector<1x8x128xf32>
    %185 = arith.addf %179, %184 : vector<1x8x128xf32>
    %c2_i32_86 = arith.constant 2 : i32
    %186 = vector.broadcast %c2_i32_86 : i32 to vector<1x8x128xi32>
    %187 = arith.cmpi eq, %173, %186 : vector<1x8x128xi32>
    %cst_87 = arith.constant 0.000000e+00 : f32
    %188 = vector.broadcast %172 : f32 to vector<1x8x128xf32>
    %189 = vector.broadcast %cst_87 : f32 to vector<1x8x128xf32>
    %190 = arith.select %187, %188, %189 : vector<1x8x128xi1>, vector<1x8x128xf32>
    %191 = arith.addf %185, %190 : vector<1x8x128xf32>
    %192 = arith.addf %174, %191 : vector<1x8x128xf32>
    %c0_88 = arith.constant 0 : index
    %c0_89 = arith.constant 0 : index
    %c0_90 = arith.constant 0 : index
    %193 = vector.load %arg5[%c0_88, %c0_89, %c0_90] : memref<1x8x128xf32, #tpu.memory_space<vmem>>, vector<1x8x128xf32>
    tpu.vector_store %arg5[%c0_88, %c0_89, %c0_90], %192 {strides = array<i32>} : memref<1x8x128xf32, #tpu.memory_space<vmem>>, vector<1x8x128xf32>,
    return
  }
  func.func @transform_0(%arg0: i32, %arg1: i32) -> (i32, i32, i32) {
    %c0_i32 = arith.constant 0 : i32
    %c0_i32_0 = arith.constant 0 : i32
    return %arg0, %arg1, %c0_i32 : i32, i32, i32
  }
  func.func @transform_1(%arg0: i32, %arg1: i32) -> (i32, i32, i32) {
    %c0_i32 = arith.constant 0 : i32
    %c0_i32_0 = arith.constant 0 : i32
    return %arg0, %arg1, %c0_i32 : i32, i32, i32
  }
  func.func @transform_2(%arg0: i32, %arg1: i32) -> (i32, i32, i32, i32) {
    %c0_i32 = arith.constant 0 : i32
    %c0_i32_0 = arith.constant 0 : i32
    %c0_i32_1 = arith.constant 0 : i32
    return %arg0, %c0_i32, %arg1, %c0_i32_0 : i32, i32, i32, i32
  }
  func.func @transform_3(%arg0: i32, %arg1: i32) -> (i32, i32, i32) {
    %c0_i32 = arith.constant 0 : i32
    %c0_i32_0 = arith.constant 0 : i32
    %c0_i32_1 = arith.constant 0 : i32
    return %arg0, %c0_i32, %c0_i32_0 : i32, i32, i32
  }
}

</mosaic_0001>

<llo_original>
// kernel: tpu_custom_call.1
$region0: #{tpu_custom_call.1}
  #allocation0 [shape = 'u32[]', space=smem, size = 0x4, offset = 0x4, fixed_abs, tag = 'smem constant byte address 0x4 - core index']
  #allocation1 [shape = 'u32[144,128]{1,0:T(1,128)}', space=vmem, size = 0x12000, scoped, tag = 'internal scratch']
  #allocation2 [shape = 'f32[8,128]{1,0:T(8,128)}', space=vmem, size = 0x1000, scoped, tag = 'scratch operand']
  #allocation3 [shape = 'f32[8,128]{1,0:T(8,128)}', space=vmem, size = 0x1000, scoped, tag = 'scratch operand']
  #allocation4 [shape = 'f32[8,128]{1,0:T(8,128)}', space=vmem, size = 0x1000, scoped, tag = 'scratch operand']
  #allocation5 [shape = 'f32[8,128]{1,0:T(8,128)}', space=vmem, size = 0x1000, scoped, tag = 'scratch operand']
  %s0 = inlined_call_operand.hbm [shape: f32[2,32,128], index: 0, kind: input, shape index: {}]
  %s1 = inlined_call_operand.hbm [shape: f32[2,32,128], index: 1, kind: input, shape index: {}]
  %s2 = inlined_call_operand.hbm [shape: f32[2,3,32,128], index: 2, kind: input, shape index: {}]
  %s3 = inlined_call_operand.hbm [shape: f32[2,8,128], index: 3, kind: output, shape index: {}]
  %s4 = sld [smem:[#allocation0]]
  $region61: #{tpu_custom_call.1} parent=0
    _
  %s6 = ssub.s32 1, %s4
  %s7 = scalar_select 0, %s6, %s4
  $region1: #{tpu_custom_call.1} parent=0
    #allocation6 [shape = 'u8[8192]{0}', space=vmem, size = 0x2000, scoped, tag = 'input window, operand 0']
    #allocation7 [shape = 's32[2]{0}', space=sflag, size = 0x8, scoped, tag = 'scoped memory for tpu_custom_call.1']
    #allocation8 [shape = 's32[2]{0}', space=sflag, size = 0x8, scoped, tag = 'scoped memory for tpu_custom_call.1']
    #allocation9 [shape = 'u8[8192]{0}', space=vmem, size = 0x2000, scoped, tag = 'input window, operand 1']
    #allocation10 [shape = 's32[2]{0}', space=sflag, size = 0x8, scoped, tag = 'scoped memory for tpu_custom_call.1']
    #allocation11 [shape = 'u8[24576]{0}', space=vmem, size = 0x6000, scoped, tag = 'input window, operand 2']
    #allocation12 [shape = 'u8[8192]{0}', space=vmem, size = 0x2000, scoped, tag = 'output window, operand 0']
    %8 = vsyncpa [#allocation7], 0
    %s9 = scalar_lea.sflag [#allocation7], 1
    %10 = vsyncpa %s9, 0
    %11 = vsyncpa [#allocation10], 0
    %s12 = scalar_lea.sflag [#allocation10], 1
    %13 = vsyncpa %s12, 0
    %14 = vsyncpa [#allocation8], 0
    %s15 = scalar_lea.sflag [#allocation8], 1
    %16 = vsyncpa %s15, 0
    loop: start=0, step=1, limit=10
    $region2: #{tpu_custom_call.1} parent=1 // loop_pre_header
      _
    $region3: #{tpu_custom_call.1} parent=1 // loop_header
      %s18 = sphi 0, %s22
      %p19 = scmp.ge.s32.totalorder %s18, 10
      %s25 = sphi 0, %s37
      %s26 = sphi 0, %s33
      %s27 = sphi 0, %s25
      %s28 = sphi 0, %s26
      %s29 = sphi 0, %s27
      %s30 = sphi 0, %s28
      %s42 = sphi 0, %s44
      %s45 = sphi 0, %s42
      %s46 = sphi 0, %s45
      %s62 = sphi 0, %s46
      %s70 = sphi 0, %s72
      %s73 = sphi 0, %s70
      %s74 = sphi 0, %s73
      %s90 = sphi 0, %s74
      %s98 = sphi 0, %s100
      %s101 = sphi 0, %s98
      %s102 = sphi 0, %s101
      %s118 = sphi 0, %s102
      %s124 = sphi 0, %s126
      %s127 = sphi 0, %s124
      %s128 = sphi 0, %s127
      %s144 = sphi 0, %s128
    $region4: #{tpu_custom_call.1} parent=1 // loop_header_branch
      %21 = sbr.rel (%p19) target = $region8
    $region5: #{tpu_custom_call.1} parent=1 // loop_body
      %s23 = ssub.s32 %s18, 1
      %s24 = ssub.s32 %s18, 2
      %s31 = sadd.s32 1, %s26
      %p32 = scmp.ge.s32.totalorder %s31, 4
      %s33 = scalar_select %p32, 0, %s31
      %s34 = sadd.s32 1, %s25
      %s35 = scalar_select %p32, %s34, %s25
      %p36 = scmp.ge.s32.totalorder %s35, 2
      %s37 = scalar_select %p36, 0, %s35
      %s38 = ssub.s32 %s25, %s37
      %s39 = ssub.s32 %s26, %s33
      %s40 = sor.u32 %s38, %s39
      %p41 = scmp.eq.s32.totalorder %s40, 0
      %s43 = sadd.s32 %s42, 1
      %s44 = scalar_select %p41, %s42, %s43
      %p47 = pneg %p41
      %p48 = scmp.eq.s32.totalorder %s18, 7
      %p49 = por %p47, %p48
      %p50 = scmp.ne.s32.totalorder %s42, %s45
      %p51 = scmp.eq.s32.totalorder %s18, 0
      %p52 = por %p50, %p51
      %p53 = scmp.ne.s32.totalorder %s42, %s45
      %p54 = scmp.eq.s32.totalorder %s23, 7
      %p55 = por %p53, %p54
      %p56 = scmp.ne.s32.totalorder %s45, %s46
      %p57 = scmp.eq.s32.totalorder %s23, 0
      %p58 = por %p56, %p57
      %p59 = scmp.ne.s32.totalorder %s45, %s46
      %p60 = scmp.eq.s32.totalorder %s24, 7
      %p61 = por %p59, %p60
      %p63 = scmp.ne.s32.totalorder %s46, %s62
      %p64 = scmp.eq.s32.totalorder %s24, 0
      %p65 = por %p63, %p64
      %s66 = ssub.s32 %s25, %s37
      %s67 = ssub.s32 %s26, %s33
      %s68 = sor.u32 %s66, %s67
      %p69 = scmp.eq.s32.totalorder %s68, 0
      %s71 = sadd.s32 %s70, 1
      %s72 = scalar_select %p69, %s70, %s71
      %p75 = pneg %p69
      %p76 = scmp.eq.s32.totalorder %s18, 7
      %p77 = por %p75, %p76
      %p78 = scmp.ne.s32.totalorder %s70, %s73
      %p79 = scmp.eq.s32.totalorder %s18, 0
      %p80 = por %p78, %p79
      %p81 = scmp.ne.s32.totalorder %s70, %s73
      %p82 = scmp.eq.s32.totalorder %s23, 7
      %p83 = por %p81, %p82
      %p84 = scmp.ne.s32.totalorder %s73, %s74
      %p85 = scmp.eq.s32.totalorder %s23, 0
      %p86 = por %p84, %p85
      %p87 = scmp.ne.s32.totalorder %s73, %s74
      %p88 = scmp.eq.s32.totalorder %s24, 7
      %p89 = por %p87, %p88
      %p91 = scmp.ne.s32.totalorder %s74, %s90
      %p92 = scmp.eq.s32.totalorder %s24, 0
      %p93 = por %p91, %p92
      %s94 = ssub.s32 %s25, %s37
      %s95 = ssub.s32 %s26, %s33
      %s96 = sor.u32 %s94, %s95
      %p97 = scmp.eq.s32.totalorder %s96, 0
      %s99 = sadd.s32 %s98, 1
      %s100 = scalar_select %p97, %s98, %s99
      %p103 = pneg %p97
      %p104 = scmp.eq.s32.totalorder %s18, 7
      %p105 = por %p103, %p104
      %p106 = scmp.ne.s32.totalorder %s98, %s101
      %p107 = scmp.eq.s32.totalorder %s18, 0
      %p108 = por %p106, %p107
      %p109 = scmp.ne.s32.totalorder %s98, %s101
      %p110 = scmp.eq.s32.totalorder %s23, 7
      %p111 = por %p109, %p110
      %p112 = scmp.ne.s32.totalorder %s101, %s102
      %p113 = scmp.eq.s32.totalorder %s23, 0
      %p114 = por %p112, %p113
      %p115 = scmp.ne.s32.totalorder %s101, %s102
      %p116 = scmp.eq.s32.totalorder %s24, 7
      %p117 = por %p115, %p116
      %p119 = scmp.ne.s32.totalorder %s102, %s118
      %p120 = scmp.eq.s32.totalorder %s24, 0
      %p121 = por %p119, %p120
      %s122 = ssub.s32 %s25, %s37
      %p123 = scmp.eq.s32.totalorder %s122, 0
      %s125 = sadd.s32 %s124, 1
      %s126 = scalar_select %p123, %s124, %s125
      %p129 = pneg %p123
      %p130 = scmp.eq.s32.totalorder %s18, 7
      %p131 = por %p129, %p130
      %p132 = scmp.ne.s32.totalorder %s124, %s127
      %p133 = scmp.eq.s32.totalorder %s18, 0
      %p134 = por %p132, %p133
      %p135 = scmp.ne.s32.totalorder %s124, %s127
      %p136 = scmp.eq.s32.totalorder %s23, 7
      %p137 = por %p135, %p136
      %p138 = scmp.ne.s32.totalorder %s127, %s128
      %p139 = scmp.eq.s32.totalorder %s23, 0
      %p140 = por %p138, %p139
      %p141 = scmp.ne.s32.totalorder %s127, %s128
      %p142 = scmp.eq.s32.totalorder %s24, 7
      %p143 = por %p141, %p142
      %p145 = scmp.ne.s32.totalorder %s128, %s144
      %p146 = scmp.eq.s32.totalorder %s24, 0
      %p147 = por %p145, %p146
      %p148 = scmp.le.s32.totalorder 1, %s18
      %p149 = scmp.lt.s32.totalorder %s18, 9
      %p150 = pnand %p148, %p149
      %p151 = pneg %p150
      // Predicated region
      $region9: #{tpu_custom_call.1} parent=5 // pred_check
        _
      $region10: #{tpu_custom_call.1} parent=5 // pred_check_branch
        %153 = sbr.rel (%p150) target = $region12
      $region11: #{tpu_custom_call.1} parent=5 // pred_region
        %s154 = ssub.s32 %s18, 1
      $region12: #{tpu_custom_call.1} parent=5 // pred_fallthru
        _
      %p155 = scmp.lt.s32.totalorder %s18, 8
      // Predicated region
      $region13: #{tpu_custom_call.1} parent=5 // pred_check
        %p156 = pneg %p155
      $region14: #{tpu_custom_call.1} parent=5 // pred_check_branch
        %158 = sbr.rel (%p156) target = $region16
      $region15: #{tpu_custom_call.1} parent=5 // pred_region
        // Predicated region
        $region17: #{tpu_custom_call.1} parent=15 // pred_check
          %p159 = pneg %p52
        $region18: #{tpu_custom_call.1} parent=15 // pred_check_branch
          %161 = sbr.rel (%p159) target = $region20
        $region19: #{tpu_custom_call.1} parent=15 // pred_region
          %s162 = sand.u32 %s42, 1
          %s163 = scalar_lea.sflag [#allocation7], %s162
          %s164 = sand.u32 %s42, 1
          %s165 = smul.addr %s164, 8
          %s166 = scalar_lea.vmem [#allocation6], %s165
          %s168 = ssub.s32 128, 128
          %169 = vsyncadd %s163, %s168
          %s170 = smul.addr %s25, 4
          %s171 = sadd.s32 %s26, %s170
          %s172 = smul.addr %s171, 128
          %s173 = scalar_lea.hbm %s0, %s172
          %s175 = sshll.u32 %s166, 4
          %s176 = int_to_ptr.vmem [resolvable:$true] %s175
          %178 = dma.hbm_to_vmem [thread:$0]  %s173, 128, %s176, %s163
        $region20: #{tpu_custom_call.1} parent=15 // pred_fallthru
          _
        // Predicated region
        $region21: #{tpu_custom_call.1} parent=15 // pred_check
          %p179 = pneg %p80
        $region22: #{tpu_custom_call.1} parent=15 // pred_check_branch
          %181 = sbr.rel (%p179) target = $region24
        $region23: #{tpu_custom_call.1} parent=15 // pred_region
          %s182 = sand.u32 %s18, 1
          %s183 = scalar_lea.sflag [#allocation10], %s182
          %s184 = sand.u32 %s70, 1
          %s185 = smul.addr %s184, 8
          %s186 = scalar_lea.vmem [#allocation9], %s185
          %s188 = ssub.s32 128, 128
          %189 = vsyncadd %s183, %s188
          %s190 = smul.addr %s25, 4
          %s191 = sadd.s32 %s26, %s190
          %s192 = smul.addr %s191, 128
          %s193 = scalar_lea.hbm %s1, %s192
          %s195 = sshll.u32 %s186, 4
          %s196 = int_to_ptr.vmem [resolvable:$true] %s195
          %198 = dma.hbm_to_vmem [thread:$0]  %s193, 128, %s196, %s183
        $region24: #{tpu_custom_call.1} parent=15 // pred_fallthru
          _
        // Predicated region
        $region25: #{tpu_custom_call.1} parent=15 // pred_check
          %p199 = pneg %p108
        $region26: #{tpu_custom_call.1} parent=15 // pred_check_branch
          %201 = sbr.rel (%p199) target = $region28
        $region27: #{tpu_custom_call.1} parent=15 // pred_region
          %s202 = sand.u32 %s18, 1
          %s203 = scalar_lea.sflag [#allocation10], %s202
          %s204 = sand.u32 %s98, 1
          %s205 = smul.addr %s204, 24
          %s206 = scalar_lea.vmem [#allocation11], %s205
          %s208 = ssub.s32 384, 384
          %209 = vsyncadd %s203, %s208
          %s210 = smul.addr %s25, 12
          %s211 = sadd.s32 %s26, %s210
          %s212 = smul.addr %s211, 128
          %s213 = scalar_lea.hbm %s2, %s212
          %s214 = sshll.u32 %s206, 4
          %s215 = int_to_ptr.vmem [resolvable:$true] %s214
          %220 = dma.hbm_to_vmem [thread:$0]  %s213, 384, %s215, %s203, 512, 128, 8
        $region28: #{tpu_custom_call.1} parent=15 // pred_fallthru
          _
      $region16: #{tpu_custom_call.1} parent=5 // pred_fallthru
        _
      %p221 = scmp.le.s32.totalorder 1, %s18
      %p222 = scmp.lt.s32.totalorder %s18, 9
      %p223 = pnand %p221, %p222
      %p224 = pneg %p223
      // Predicated region
      $region29: #{tpu_custom_call.1} parent=5 // pred_check
        _
      $region30: #{tpu_custom_call.1} parent=5 // pred_check_branch
        %226 = sbr.rel (%p223) target = $region32
      $region31: #{tpu_custom_call.1} parent=5 // pred_region
        %s227 = ssub.s32 %s18, 1
        %s228 = sand.u32 %s45, 1
        %s229 = scalar_lea.sflag [#allocation7], %s228
        %s230 = sand.u32 %s45, 1
        %s231 = smul.addr %s230, 8
        %s232 = scalar_lea.vmem [#allocation6], %s231
        // Predicated region
        $region33: #{tpu_custom_call.1} parent=31 // pred_check
          %p233 = pneg %p58
        $region34: #{tpu_custom_call.1} parent=31 // pred_check_branch
          %235 = sbr.rel (%p233) target = $region36
        $region35: #{tpu_custom_call.1} parent=31 // pred_region
          %236 = dma.done %s229, 128
        $region36: #{tpu_custom_call.1} parent=31 // pred_fallthru
          _
        %s237 = sand.u32 %s23, 1
        %s238 = scalar_lea.sflag [#allocation10], %s237
        %s239 = sand.u32 %s73, 1
        %s240 = smul.addr %s239, 8
        %s241 = scalar_lea.vmem [#allocation9], %s240
        // Predicated region
        $region37: #{tpu_custom_call.1} parent=31 // pred_check
          %p242 = pneg %p86
        $region38: #{tpu_custom_call.1} parent=31 // pred_check_branch
          %244 = sbr.rel (%p242) target = $region40
        $region39: #{tpu_custom_call.1} parent=31 // pred_region
          %245 = dma.done %s238, 128
        $region40: #{tpu_custom_call.1} parent=31 // pred_fallthru
          _
        %s246 = sand.u32 %s23, 1
        %s247 = scalar_lea.sflag [#allocation10], %s246
        %s248 = sand.u32 %s101, 1
        %s249 = smul.addr %s248, 24
        %s250 = scalar_lea.vmem [#allocation11], %s249
        // Predicated region
        $region41: #{tpu_custom_call.1} parent=31 // pred_check
          %p251 = pneg %p114
        $region42: #{tpu_custom_call.1} parent=31 // pred_check_branch
          %253 = sbr.rel (%p251) target = $region44
        $region43: #{tpu_custom_call.1} parent=31 // pred_region
          %254 = dma.done %s247, 384
        $region44: #{tpu_custom_call.1} parent=31 // pred_fallthru
          _
        %s255 = sand.u32 %s45, 1
        %s256 = scalar_lea.sflag [#allocation7], %s255
        %s257 = sand.u32 %s45, 1
        %s258 = smul.addr %s257, 8
        %s259 = scalar_lea.vmem [#allocation6], %s258
        %p260 = pneg %p58
        %p261 = pneg %p55
        %s262 = sand.u32 %s23, 1
        %s263 = scalar_lea.sflag [#allocation10], %s262
        %s264 = sand.u32 %s73, 1
        %s265 = smul.addr %s264, 8
        %s266 = scalar_lea.vmem [#allocation9], %s265
        %p267 = pneg %p86
        %p268 = pneg %p83
        %s269 = sand.u32 %s23, 1
        %s270 = scalar_lea.sflag [#allocation10], %s269
        %s271 = sand.u32 %s101, 1
        %s272 = smul.addr %s271, 24
        %s273 = scalar_lea.vmem [#allocation11], %s272
        %p274 = pneg %p114
        %p275 = pneg %p111
        %p276 = pneg %p140
        %p277 = pneg %p137
        %s278 = sand.u32 %s127, 1
        %s279 = scalar_lea.sflag [#allocation8], %s278
        %s280 = sand.u32 %s127, 1
        %s281 = smul.addr %s280, 8
        %s282 = scalar_lea.vmem [#allocation12], %s281
        %p283 = scmp.eq.s32.totalorder %s28, 0
        // Predicated region
        $region45: #{tpu_custom_call.1} parent=31 // pred_check
          %p284 = pneg %p283
        $region46: #{tpu_custom_call.1} parent=31 // pred_check_branch
          %286 = sbr.rel (%p284) target = $region48
        $region47: #{tpu_custom_call.1} parent=31 // pred_region
          %287 = vst [vmem:[%s282] sm:$0xff] 0.0
          %288 = vst [vmem:[#allocation2] sm:$0xff] 0.0
          %289 = vst [vmem:[#allocation3] sm:$0xff] 0.0
          %290 = vst [vmem:[#allocation4] sm:$0xff] 0.0
          %291 = vst [vmem:[#allocation5] sm:$0xff] 0.0
        $region48: #{tpu_custom_call.1} parent=31 // pred_fallthru
          _
        %v292 = vld [vmem:[%s232] sm:$0xff]
        %v293 = vld [vmem:[%s241] sm:$0xff]
        %v294 = vlog2.pop %v292
        %v295 = vmul.f32 %v294, 0.6931472
        %v296 = vmax.f32 %v295, -100.0
        %v297 = vsub.f32 1.0, %v292
        %v298 = vlog2.pop %v297
        %v299 = vmul.f32 %v298, 0.6931472
        %v300 = vmax.f32 %v299, -100.0
        %v301 = vsub.f32 %v296, %v300
        %v302 = vmul.f32 %v293, %v301
        %v303 = vadd.f32 %v300, %v302
        %v304 = vsub.f32 0.0, %v303
        %305 = vadd.xlane.f32.xlu0 %v304
        %v306 = vpop.xlane.xlu0 %305
        %v307 = vrot.slane %v306, 4
        %v308 = vadd.f32 %v306, %v307
        %v309 = vrot.slane %v308, 2
        %v310 = vadd.f32 %v308, %v309
        %v311 = vrot.slane %v310, 1
        %v312 = vadd.f32 %v310, %v311
        %s313 = vtos %v312
        %v314 = vld [vmem:[%s250] sm:$0xff]
        %v315 = vmul.f32 %v314, 0.2989
        %s316 = scalar_lea.vmem %s250, 8 [#allocation11]
        %v317 = vld [vmem:[%s316] sm:$0xff]
        %v318 = vmul.f32 %v317, 0.587
        %v319 = vadd.f32 %v315, %v318
        %s320 = scalar_lea.vmem %s250, 16 [#allocation11]
        %v321 = vld [vmem:[%s320] sm:$0xff]
        %v322 = vmul.f32 %v321, 0.114
        %v323 = vadd.f32 %v319, %v322
        %324 = vrot.lane.b32.xlu0 %v323, 1
        %v325 = vpop.permute.xlu0 %324
        %326 = vrot.lane.b32.xlu0 %v323, 2
        %v327 = vpop.permute.xlu0 %326
        %v328 = vmul.f32 %v325, 2.0
        %v329 = vadd.f32 %v327, %v328
        %v330 = vadd.f32 %v329, %v323
        %v331 = vsub.f32 %v327, %v323
        %332 = vrot.lane.b32.xlu0 %v292, 1
        %v333 = vpop.permute.xlu0 %332
        %334 = vrot.lane.b32.xlu0 %v292, 2
        %v335 = vpop.permute.xlu0 %334
        %v336 = vmul.f32 %v333, 2.0
        %v337 = vadd.f32 %v335, %v336
        %v338 = vadd.f32 %v337, %v292
        %v339 = vsub.f32 %v335, %v292
        %v340 = vlaneseq
        %v341 = vshrl.u32 %v340, 7
        %v342 = vlaneseq
        %v343 = vand.u32 %v342, 127
        %v344 = vld [vmem:[#allocation2 + $0x6] sm:$0x1]
        %v345 = vld [vmem:[#allocation2 + $0x7] sm:$0x1]
        %v346 = vld [vmem:[#allocation3 + $0x6] sm:$0x1]
        %v347 = vld [vmem:[#allocation3 + $0x7] sm:$0x1]
        %vm348 = vcmp.ge.s32.totalorder %v341, 1
        %v349 = vrot.slane %v331, 7
        %v350 = vlaneseq
        %v351 = vshrl.u32 %v350, 7
        %v352 = vsub.s32 0, %v351
        %v353 = vrot.slane %v347, %v352
        %v354 = vsel %vm348, %v349, %v353
        %vm355 = vcmp.ge.s32.totalorder %v341, 2
        %v356 = vrot.slane %v330, 6
        %vm357 = vcmp.eq.s32.totalorder %v341, 0
        %v358 = vlaneseq
        %v359 = vshrl.u32 %v358, 7
        %v360 = vsub.s32 0, %v359
        %v361 = vrot.slane %v344, %v360
        %v362 = vlaneseq
        %v363 = vshrl.u32 %v362, 7
        %v364 = vsub.s32 0, %v363
        %v365 = vrot.slane %v345, %v364
        %v366 = vsel %vm357, %v361, %v365
        %v367 = vsel %vm355, %v356, %v366
        %v368 = vrot.slane %v331, 6
        %v369 = vlaneseq
        %v370 = vshrl.u32 %v369, 7
        %v371 = vsub.s32 0, %v370
        %v372 = vrot.slane %v346, %v371
        %v373 = vsel %vm357, %v372, %v353
        %v374 = vsel %vm355, %v368, %v373
        %v375 = vsub.f32 %v367, %v330
        %v376 = vmul.f32 %v375, 0.25
        %v377 = vmul.f32 %v354, 2.0
        %v378 = vadd.f32 %v374, %v377
        %v379 = vadd.f32 %v378, %v331
        %v380 = vmul.f32 %v379, 0.25
        %v381 = vld [vmem:[#allocation4 + $0x6] sm:$0x1]
        %v382 = vld [vmem:[#allocation4 + $0x7] sm:$0x1]
        %v383 = vld [vmem:[#allocation5 + $0x6] sm:$0x1]
        %v384 = vld [vmem:[#allocation5 + $0x7] sm:$0x1]
        %v385 = vrot.slane %v339, 7
        %v386 = vlaneseq
        %v387 = vshrl.u32 %v386, 7
        %v388 = vsub.s32 0, %v387
        %v389 = vrot.slane %v384, %v388
        %v390 = vsel %vm348, %v385, %v389
        %v391 = vrot.slane %v338, 6
        %v392 = vlaneseq
        %v393 = vshrl.u32 %v392, 7
        %v394 = vsub.s32 0, %v393
        %v395 = vrot.slane %v381, %v394
        %v396 = vlaneseq
        %v397 = vshrl.u32 %v396, 7
        %v398 = vsub.s32 0, %v397
        %v399 = vrot.slane %v382, %v398
        %v400 = vsel %vm357, %v395, %v399
        %v401 = vsel %vm355, %v391, %v400
        %v402 = vrot.slane %v339, 6
        %v403 = vlaneseq
        %v404 = vshrl.u32 %v403, 7
        %v405 = vsub.s32 0, %v404
        %v406 = vrot.slane %v383, %v405
        %v407 = vsel %vm357, %v406, %v389
        %v408 = vsel %vm355, %v402, %v407
        %v409 = vsub.f32 %v401, %v338
        %v410 = vmul.f32 %v409, 0.25
        %v411 = vmul.f32 %v390, 2.0
        %v412 = vadd.f32 %v408, %v411
        %v413 = vadd.f32 %v412, %v339
        %v414 = vmul.f32 %v413, 0.25
        %415 = vst [vmem:[#allocation2] sm:$0xff] %v330
        %416 = vst [vmem:[#allocation3] sm:$0xff] %v331
        %417 = vst [vmem:[#allocation4] sm:$0xff] %v338
        %418 = vst [vmem:[#allocation5] sm:$0xff] %v339
        %s419 = smul.u32 %s28, 8
        %v420 = vstv %s419
        %v421 = vadd.s32 %v341, %v420
        %vm422 = vcmp.ge.s32.totalorder %v421, 2
        %vm423 = vcmp.ge.s32.totalorder %v343, 2
        %vm424 = vmand %vm422, %vm423
        %v425 = vmul.f32 %v414, %v414
        %v426 = vmul.f32 %v410, %v410
        %v427 = vadd.f32 %v425, %v426
        %v428 = vadd.f32 %v427, 1e-06
        %v429 = vrsqrt.pop %v428
        %v430 = vmul.f32 %v428, %v429
        %vm431 = vcmp.eq.f32.partialorder %v428, inf
        %v432 = vsel %vm431, %v428, %v430
        %vm433 = vcmp.eq.f32.partialorder %v428, 0.0
        %v434 = vand.u32 %v428, 2147483648
        %v435 = vsel %vm433, %v434, %v432
        %v436 = vmul.f32 %v380, %v414
        %v437 = vmul.f32 %v376, %v410
        %v438 = vadd.f32 %v436, %v437
        %v439 = vmul.f32 %v438, %v438
        %v440 = vsub.f32 1.0, %v439
        %v441 = vmul.f32 %v435, %v440
        %v442 = vsel %vm424, %v441, 0.0
        %443 = vadd.xlane.f32.xlu0 %v442
        %v444 = vpop.xlane.xlu0 %443
        %v445 = vrot.slane %v444, 4
        %v446 = vadd.f32 %v444, %v445
        %v447 = vrot.slane %v446, 2
        %v448 = vadd.f32 %v446, %v447
        %v449 = vrot.slane %v448, 1
        %v450 = vadd.f32 %v448, %v449
        %s451 = vtos %v450
        %v452 = vsel %vm424, %v435, 0.0
        %453 = vadd.xlane.f32.xlu0 %v452
        %v454 = vpop.xlane.xlu0 %453
        %v455 = vrot.slane %v454, 4
        %v456 = vadd.f32 %v454, %v455
        %v457 = vrot.slane %v456, 2
        %v458 = vadd.f32 %v456, %v457
        %v459 = vrot.slane %v458, 1
        %v460 = vadd.f32 %v458, %v459
        %s461 = vtos %v460
        %v462 = vld [vmem:[%s282] sm:$0xff]
        %vm463 = vcmp.eq.s32.totalorder %v343, 0
        %v464 = vstv %s313
        %v465 = vsel %vm463, %v464, 0.0
        %vm466 = vcmp.eq.s32.totalorder %v343, 1
        %v467 = vstv %s451
        %v468 = vsel %vm466, %v467, 0.0
        %v469 = vadd.f32 %v465, %v468
        %vm470 = vcmp.eq.s32.totalorder %v343, 2
        %v471 = vstv %s461
        %v472 = vsel %vm470, %v471, 0.0
        %v473 = vadd.f32 %v469, %v472
        %v474 = vadd.f32 %v462, %v473
        %475 = vst [vmem:[%s282] sm:$0xff] %v474
        %s476 = sand.u32 %s127, 1
        %s477 = scalar_lea.sflag [#allocation8], %s476
        %s478 = sand.u32 %s127, 1
        %s479 = smul.addr %s478, 8
        %s480 = scalar_lea.vmem [#allocation12], %s479
        // Predicated region
        $region49: #{tpu_custom_call.1} parent=31 // pred_check
          %p481 = pneg %p137
        $region50: #{tpu_custom_call.1} parent=31 // pred_check_branch
          %483 = sbr.rel (%p481) target = $region52
        $region51: #{tpu_custom_call.1} parent=31 // pred_region
          %s485 = ssub.s32 128, 128
          %486 = vsyncadd %s477, %s485
          %s487 = smul.addr %s27, 128
          %s488 = scalar_lea.hbm %s3, %s487
          %s490 = sshll.u32 %s480, 4
          %s491 = int_to_ptr.vmem [resolvable:$true] %s490
          %493 = dma.vmem_to_hbm [thread:$0]  %s491, 128, %s488, %s477
        $region52: #{tpu_custom_call.1} parent=31 // pred_fallthru
          _
      $region32: #{tpu_custom_call.1} parent=5 // pred_fallthru
        _
      %p494 = scmp.le.s32.totalorder 2, %s18
      // Predicated region
      $region53: #{tpu_custom_call.1} parent=5 // pred_check
        %p495 = pneg %p494
      $region54: #{tpu_custom_call.1} parent=5 // pred_check_branch
        %497 = sbr.rel (%p495) target = $region56
      $region55: #{tpu_custom_call.1} parent=5 // pred_region
        %s498 = ssub.s32 %s18, 2
        // Predicated region
        $region57: #{tpu_custom_call.1} parent=55 // pred_check
          %p499 = pneg %p143
        $region58: #{tpu_custom_call.1} parent=55 // pred_check_branch
          %501 = sbr.rel (%p499) target = $region60
        $region59: #{tpu_custom_call.1} parent=55 // pred_region
          %s502 = sand.u32 %s128, 1
          %s503 = scalar_lea.sflag [#allocation8], %s502
          %s504 = sand.u32 %s128, 1
          %s505 = smul.addr %s504, 8
          %s506 = scalar_lea.vmem [#allocation12], %s505
          %507 = dma.done %s503, 128
        $region60: #{tpu_custom_call.1} parent=55 // pred_fallthru
          _
      $region56: #{tpu_custom_call.1} parent=5 // pred_fallthru
        _
    $region6: #{tpu_custom_call.1} parent=1 // loop_footer
      %s22 = sadd.s32 1, %s18
    $region7: #{tpu_custom_call.1} parent=1 // loop_footer_branch
      %17 = sbr.rel target = $region3
    $region8: #{tpu_custom_call.1} parent=1 // loop_exit
      _
    %508 = vsyncpa [#allocation7], 1
    %s509 = scalar_lea.sflag [#allocation7], 1
    %510 = vsyncpa %s509, 1
    %511 = vsyncpa [#allocation10], 1
    %s512 = scalar_lea.sflag [#allocation10], 1
    %513 = vsyncpa %s512, 1
    %514 = vsyncpa [#allocation8], 1
    %s515 = scalar_lea.sflag [#allocation8], 1
    %516 = vsyncpa %s515, 1

</llo_original>
